<compile_context>
chip_gen: v7x
topology: tpu7x:2x2x1
jax: 0.10.0
libtpu: 0.0.40
codegen_flags: <defaults>
</compile_context>

<pallas_src>
import functools
import math

import jax
import jax.numpy as jnp
from jax import lax
from jax.experimental import pallas as pl
from jax.experimental.pallas import tpu as pltpu


def _default_vmem_limit():
    """Generation-aware VMEM request: ~75% of physical, capped at 96 MiB."""
    cap = None
    try:
        info = pltpu.get_tpu_info()
        for name in ("vmem_capacity_bytes", "vmem_bytes", "vmem_size_bytes"):
            if hasattr(info, name):
                cap = int(getattr(info, name))
                break
    except Exception:
        cap = None
    if not cap:
        cap = 64 * 1024 * 1024              # conservative (v7x physical size)
    return max(32 * 1024 * 1024, min((cap * 3) // 4, 96 * 1024 * 1024))


_VMEM_LIMIT = _default_vmem_limit()


def _pick_tile(dim, target, align):
    """Largest tile <= target that divides dim and is a multiple of `align`.

    Falls back to the full dimension (always legal), but refuses a silent blow-up."""
    if dim <= target:
        return dim
    t = (target // align) * align
    while t >= align:
        if dim % t == 0:
            return t
        t -= align
    if dim > 4 * target:
        raise ValueError(
            f"_pick_tile: no aligned tile <= {target} divides {dim}; refusing to "
            f"fall back to a {dim}-wide tile (would blow the VMEM budget)")
    return dim


# ----------------------------- Pallas kernels ------------------------------

def _gelu_f32(y):
    # exact (erf) GELU, matching HF BERT "gelu"
    return 0.5 * y * (1.0 + lax.erf(y * (1.0 / math.sqrt(2.0))))


def _linear_nok_kernel(x_ref, w_ref, b_ref, o_ref, *, activation):
    """y = act(x @ W + b) with the full contraction in one step (no K grid axis)."""
    y = jnp.dot(x_ref[...], w_ref[...], preferred_element_type=jnp.float32)
    y = y + b_ref[...].astype(jnp.float32)
    if activation == "gelu":
        y = _gelu_f32(y)
    elif activation == "tanh":
        y = jnp.tanh(y)
    o_ref[...] = y.astype(o_ref.dtype)


def _linear_kernel(x_ref, w_ref, b_ref, o_ref, acc_ref, *, activation):
    """Tiled y = act(x @ W + b); K is the last ("arbitrary") grid axis."""
    k = pl.program_id(2)

    @pl.when(k == 0)
    def _():
        acc_ref[...] = jnp.zeros_like(acc_ref)

    acc_ref[...] += jnp.dot(x_ref[...], w_ref[...],
                            preferred_element_type=jnp.float32)

    @pl.when(k == pl.num_programs(2) - 1)
    def _():
        y = acc_ref[...] + b_ref[...].astype(jnp.float32)
        if activation == "gelu":
            y = _gelu_f32(y)
        elif activation == "tanh":
            y = jnp.tanh(y)
        o_ref[...] = y.astype(o_ref.dtype)


def linear(x, w, b, activation="none", out_dtype=jnp.bfloat16,
           tm=512, tn=512, tk=None):
    M, K = x.shape
    N = w.shape[1]
    tm = _pick_tile(M, tm, 8)
    tn = _pick_tile(N, tn, 128)
    if tk is None:
        tk = K if K <= 2048 else 512        # prefer full K: drops the reduction axis
    tk = _pick_tile(K, tk, 128)
    cost = pl.CostEstimate(
        flops=int(2 * M * N * K),
        transcendentals=int(M * N if activation in ("gelu", "tanh") else 0),
        bytes_accessed=int(x.size * x.dtype.itemsize + w.size * w.dtype.itemsize
                           + M * N * jnp.dtype(out_dtype).itemsize),
    )
    if tk == K:
        return pl.pallas_call(
            functools.partial(_linear_nok_kernel, activation=activation),
            out_shape=jax.ShapeDtypeStruct((M, N), out_dtype),
            grid=(M // tm, N // tn),
            in_specs=[
                pl.BlockSpec((tm, K), lambda i, j: (i, 0)),
                pl.BlockSpec((K, tn), lambda i, j: (0, j)),
                pl.BlockSpec((1, tn), lambda i, j: (0, j)),
            ],
            out_specs=pl.BlockSpec((tm, tn), lambda i, j: (i, j)),
            compiler_params=pltpu.CompilerParams(
                dimension_semantics=("parallel", "parallel"),
                vmem_limit_bytes=_VMEM_LIMIT),
            cost_estimate=cost,
        )(x, w, b.reshape(1, N))

    return pl.pallas_call(
        functools.partial(_linear_kernel, activation=activation),
        out_shape=jax.ShapeDtypeStruct((M, N), out_dtype),
        grid=(M // tm, N // tn, K // tk),
        in_specs=[
            pl.BlockSpec((tm, tk), lambda i, j, k: (i, k)),
            pl.BlockSpec((tk, tn), lambda i, j, k: (k, j)),
            pl.BlockSpec((1, tn), lambda i, j, k: (0, j)),
        ],
        out_specs=pl.BlockSpec((tm, tn), lambda i, j, k: (i, j)),
        scratch_shapes=[pltpu.VMEM((tm, tn), jnp.float32)],
        compiler_params=pltpu.CompilerParams(
            dimension_semantics=("parallel", "parallel", "arbitrary"),
            vmem_limit_bytes=_VMEM_LIMIT),
        cost_estimate=cost,
    )(x, w, b.reshape(1, N))


def _ln_kernel(x_ref, g_ref, b_ref, o_ref, *, eps):
    x = x_ref[...].astype(jnp.float32)
    mean = jnp.mean(x, axis=-1, keepdims=True)
    cent = x - mean
    var = jnp.mean(cent * cent, axis=-1, keepdims=True)
    o_ref[...] = (cent * lax.rsqrt(var + eps) * g_ref[...].astype(jnp.float32)
                  + b_ref[...].astype(jnp.float32)).astype(o_ref.dtype)


def layer_norm(x, gamma, beta, eps=1e-12, out_dtype=jnp.bfloat16, tm=512):
    """Row-tiled LayerNorm (no residual) — used for the embedding LN."""
    M, H = x.shape
    tm = _pick_tile(M, tm, 8)
    cost = pl.CostEstimate(
        flops=int(8 * M * H),
        transcendentals=int(M),
        bytes_accessed=int(x.size * x.dtype.itemsize + 2 * H * 4
                           + M * H * jnp.dtype(out_dtype).itemsize),
    )
    return pl.pallas_call(
        functools.partial(_ln_kernel, eps=eps),
        out_shape=jax.ShapeDtypeStruct((M, H), out_dtype),
        grid=(M // tm,),
        in_specs=[
            pl.BlockSpec((tm, H), lambda i: (i, 0)),
            pl.BlockSpec((1, H), lambda i: (0, 0)),
            pl.BlockSpec((1, H), lambda i: (0, 0)),
        ],
        out_specs=pl.BlockSpec((tm, H), lambda i: (i, 0)),
        compiler_params=pltpu.CompilerParams(
            dimension_semantics=("parallel",),
            vmem_limit_bytes=_VMEM_LIMIT),
        cost_estimate=cost,
    )(x, gamma.reshape(1, H), beta.reshape(1, H))


def _attention_kernel(qkv_ref, bias_ref, o_ref, *, scale):
    """One (batch, head) grid point.  Blocks are head-major (S, d) — no in-kernel
    lane extraction, no concat; the mask bias (1, S) is broadcast over query rows so
    the (B,1,S,S) mask is never materialized in HBM."""
    q = qkv_ref[0, 0, 0]                           # (S, d) bf16
    k = qkv_ref[1, 0, 0]
    v = qkv_ref[2, 0, 0]
    bias = bias_ref[0].astype(jnp.float32)         # (1, S)
    # contract last dims of q and k directly (avoid an explicit k.T).
    # TODO(synk): verify via pl.lower_as_mlir on v6e that this does not insert a
    # vxpose of K; if it does, emit K pre-transposed from the QKV projection.
    s = lax.dot_general(q, k, (((1,), (1,)), ((), ())),
                        preferred_element_type=jnp.float32) * scale + bias
    m = jnp.max(s, axis=-1, keepdims=True)
    p = jnp.exp(s - m)
    p = p / jnp.sum(p, axis=-1, keepdims=True)     # exact divide (matches reference)
    ctx = jnp.dot(p.astype(v.dtype), v, preferred_element_type=jnp.float32)
    o_ref[0, 0] = ctx.astype(o_ref.dtype)


def attention(qkv_heads, mask_bias, *, scale):
    # TODO(synk): for very long sequences (S >= ~1024 on v7x) add a KV-tile grid
    # axis with online-softmax scratch (flash-style) to keep VMEM flat in S.
    _, B, n_heads, S, d = qkv_heads.shape
    cost = pl.CostEstimate(
        flops=int(B * n_heads * (4 * S * S * d + 6 * S * S)),
        transcendentals=int(B * n_heads * S * S),
        bytes_accessed=int(qkv_heads.size * qkv_heads.dtype.itemsize
                           + mask_bias.size * mask_bias.dtype.itemsize
                           + B * n_heads * S * d * 2),
    )
    return pl.pallas_call(
        functools.partial(_attention_kernel, scale=scale),
        out_shape=jax.ShapeDtypeStruct((B, n_heads, S, d), qkv_heads.dtype),
        grid=(B, n_heads),
        in_specs=[
            pl.BlockSpec((3, 1, 1, S, d), lambda b, h: (0, b, h, 0, 0)),
            pl.BlockSpec((1, 1, S), lambda b, h: (b, 0, 0)),
        ],
        out_specs=pl.BlockSpec((1, 1, S, d), lambda b, h: (b, h, 0, 0)),
        compiler_params=pltpu.CompilerParams(
            dimension_semantics=("parallel", "parallel"),
            vmem_limit_bytes=_VMEM_LIMIT),
        cost_estimate=cost,
    )(qkv_heads, mask_bias)


def _attn_out_ln_kernel(ctx_ref, w_ref, b_ref, r_ref, g_ref, bt_ref, o_ref,
                        *, eps, n_heads):
    """y = LayerNorm(sum_h ctx[h] @ W_o[h] + b + residual) * gamma + beta.

    Consumes the head-major attention context directly (head axis is the
    contraction), so no 'merge heads' transpose through HBM is needed."""
    acc = jnp.dot(ctx_ref[0, 0], w_ref[0], preferred_element_type=jnp.float32)
    for h in range(1, n_heads):
        acc = acc + jnp.dot(ctx_ref[0, h], w_ref[h],
                            preferred_element_type=jnp.float32)
    y = acc + b_ref[...].astype(jnp.float32) + r_ref[0].astype(jnp.float32)
    mean = jnp.mean(y, axis=-1, keepdims=True)
    cent = y - mean
    var = jnp.mean(cent * cent, axis=-1, keepdims=True)
    norm = cent * lax.rsqrt(var + eps)
    o_ref[0] = (norm * g_ref[...].astype(jnp.float32)
                + bt_ref[...].astype(jnp.float32)).astype(o_ref.dtype)


def attn_out_residual_ln(ctx, w_o, b_o, residual, gamma, beta, eps=1e-12,
                         out_dtype=jnp.bfloat16, ts=512):
    B, n_heads, S, d = ctx.shape
    H = w_o.shape[-1]
    ts = _pick_tile(S, ts, 8)
    cost = pl.CostEstimate(
        flops=int(2 * B * S * H * H + 10 * B * S * H),
        transcendentals=0,
        bytes_accessed=int(ctx.size * ctx.dtype.itemsize
                           + w_o.size * w_o.dtype.itemsize
                           + residual.size * residual.dtype.itemsize
                           + B * S * H * jnp.dtype(out_dtype).itemsize),
    )
    return pl.pallas_call(
        functools.partial(_attn_out_ln_kernel, eps=eps, n_heads=n_heads),
        out_shape=jax.ShapeDtypeStruct((B, S, H), out_dtype),
        grid=(B, S // ts),
        in_specs=[
            pl.BlockSpec((1, n_heads, ts, d), lambda b, si: (b, 0, si, 0)),
            pl.BlockSpec((n_heads, d, H), lambda b, si: (0, 0, 0)),
            pl.BlockSpec((1, H), lambda b, si: (0, 0)),
            pl.BlockSpec((1, ts, H), lambda b, si: (b, si, 0)),
            pl.BlockSpec((1, H), lambda b, si: (0, 0)),
            pl.BlockSpec((1, H), lambda b, si: (0, 0)),
        ],
        out_specs=pl.BlockSpec((1, ts, H), lambda b, si: (b, si, 0)),
        compiler_params=pltpu.CompilerParams(
            dimension_semantics=("parallel", "parallel"),
            vmem_limit_bytes=_VMEM_LIMIT),
        cost_estimate=cost,
    )(ctx, w_o, b_o.reshape(1, H), residual, gamma.reshape(1, H),
      beta.reshape(1, H))


def _ffn_kernel(x_ref, w1_ref, b1_ref, w2_ref, b2_ref, g_ref, bt_ref,
                o_ref, acc_ref, *, eps):
    """Fused FFN: y = LN(gelu(x @ W1 + b1) @ W2 + b2 + x) * gamma + beta.

    The intermediate (tm, ti) tile lives only in registers/VMEM; the reduction over
    the intermediate dimension is the 'arbitrary' grid axis."""
    j = pl.program_id(1)

    @pl.when(j == 0)
    def _():
        acc_ref[...] = jnp.zeros_like(acc_ref)

    inter = jnp.dot(x_ref[...], w1_ref[...], preferred_element_type=jnp.float32)
    inter = _gelu_f32(inter + b1_ref[...].astype(jnp.float32))
    acc_ref[...] += jnp.dot(inter.astype(jnp.bfloat16), w2_ref[...],
                            preferred_element_type=jnp.float32)

    @pl.when(j == pl.num_programs(1) - 1)
    def _():
        y = (acc_ref[...] + b2_ref[...].astype(jnp.float32)
             + x_ref[...].astype(jnp.float32))          # residual = FFN input
        mean = jnp.mean(y, axis=-1, keepdims=True)
        cent = y - mean
        var = jnp.mean(cent * cent, axis=-1, keepdims=True)
        norm = cent * lax.rsqrt(var + eps)
        o_ref[...] = (norm * g_ref[...].astype(jnp.float32)
                      + bt_ref[...].astype(jnp.float32)).astype(o_ref.dtype)


def ffn_residual_ln(x, w1, b1, w2, b2, gamma, beta, eps=1e-12,
                    out_dtype=jnp.bfloat16, tm=512, ti=512):
    M, H = x.shape
    I = w1.shape[1]
    tm = _pick_tile(M, tm, 8)
    ti = _pick_tile(I, ti, 128)
    cost = pl.CostEstimate(
        flops=int(4 * M * H * I + 10 * M * H),
        transcendentals=int(M * I + M),
        bytes_accessed=int(x.size * x.dtype.itemsize
                           + (w1.size + w2.size) * w1.dtype.itemsize
                           + M * H * jnp.dtype(out_dtype).itemsize),
    )
    return pl.pallas_call(
        functools.partial(_ffn_kernel, eps=eps),
        out_shape=jax.ShapeDtypeStruct((M, H), out_dtype),
        grid=(M // tm, I // ti),
        in_specs=[
            pl.BlockSpec((tm, H), lambda i, j: (i, 0)),   # x (also the residual)
            pl.BlockSpec((H, ti), lambda i, j: (0, j)),   # W1
            pl.BlockSpec((1, ti), lambda i, j: (0, j)),   # b1
            pl.BlockSpec((ti, H), lambda i, j: (j, 0)),   # W2
            pl.BlockSpec((1, H), lambda i, j: (0, 0)),    # b2
            pl.BlockSpec((1, H), lambda i, j: (0, 0)),    # gamma
            pl.BlockSpec((1, H), lambda i, j: (0, 0)),    # beta
        ],
        out_specs=pl.BlockSpec((tm, H), lambda i, j: (i, 0)),
        scratch_shapes=[pltpu.VMEM((tm, H), jnp.float32)],
        compiler_params=pltpu.CompilerParams(
            dimension_semantics=("parallel", "arbitrary"),
            vmem_limit_bytes=_VMEM_LIMIT),
        cost_estimate=cost,
    )(x, w1, b1.reshape(1, I), w2, b2.reshape(1, H),
      gamma.reshape(1, H), beta.reshape(1, H))


# ----------------------------- parameter init ------------------------------

def init_params(key, cfg):
    H = cfg["hidden_size"]
    I = cfg["intermediate_size"]
    L = cfg["num_layers"]
    keys = jax.random.split(key, 6 + L * 4)
    ki = iter(keys)

    def nrm(k, shape, dtype=jnp.float32):
        return (jax.random.normal(k, shape, jnp.float32) * 0.02).astype(dtype)

    params = {
        # embedding tables stored bf16: halves gather traffic; LN math stays f32
        "word_emb": nrm(next(ki), (cfg["vocab_size"], H), jnp.bfloat16),
        "pos_emb": nrm(next(ki), (cfg["max_position"], H), jnp.bfloat16),
        "type_emb": nrm(next(ki), (cfg["type_vocab"], H), jnp.bfloat16),
        "emb_ln_g": jnp.ones((H,), jnp.float32),
        "emb_ln_b": jnp.zeros((H,), jnp.float32),
        "pooler_w": nrm(next(ki), (H, H)),
        "pooler_b": jnp.zeros((H,), jnp.float32),
        "cls_w": nrm(next(ki), (H, 3)),
        "cls_b": jnp.zeros((3,), jnp.float32),
        "layers": [],
    }
    for _ in range(L):
        params["layers"].append({
            # fused Q/K/V projection: columns ordered [Wq | Wk | Wv], head-major within
            "qkv_w": nrm(next(ki), (H, 3 * H), jnp.bfloat16),
            "qkv_b": jnp.zeros((3 * H,), jnp.float32),
            "attn_out_w": nrm(next(ki), (H, H), jnp.bfloat16),
            "attn_out_b": jnp.zeros((H,), jnp.float32),
            "attn_ln_g": jnp.ones((H,), jnp.float32),
            "attn_ln_b": jnp.zeros((H,), jnp.float32),
            "inter_w": nrm(next(ki), (H, I), jnp.bfloat16),
            "inter_b": jnp.zeros((I,), jnp.float32),
            "out_w": nrm(next(ki), (I, H), jnp.bfloat16),
            "out_b": jnp.zeros((H,), jnp.float32),
            "out_ln_g": jnp.ones((H,), jnp.float32),
            "out_ln_b": jnp.zeros((H,), jnp.float32),
        })
    return params


# ------------------------------- forward pass ------------------------------

def kornli_forward(params, cfg, input_ids, token_type_ids, attention_mask):
    B, S = input_ids.shape
    H = cfg["hidden_size"]
    n_heads = cfg["num_heads"]
    d_head = H // n_heads
    scale = 1.0 / math.sqrt(d_head)

    # ---- embeddings (table gathers are plain-JAX glue; LN is Pallas) ----
    positions = jnp.arange(S, dtype=jnp.int32)
    emb = (params["word_emb"][input_ids]
           + params["pos_emb"][positions][None, :, :]
           + params["type_emb"][token_type_ids])                    # (B, S, H) bf16
    hidden = layer_norm(emb.reshape(B * S, H),
                        params["emb_ln_g"], params["emb_ln_b"])     # (B*S, H) bf16
    # dropout: identity (eval mode / deterministic)

    # ---- mask bias: tiny (B, 1, S); broadcast to (S, S) inside the kernel ----
    mask_bias = ((1.0 - attention_mask.astype(jnp.float32)) * -10000.0
                 ).reshape(B, 1, S)

    hidden_states = [hidden.reshape(B, S, H)]

    for lyr in params["layers"]:
        x = hidden                                                  # (B*S, H) bf16

        # fused Q/K/V projection: one lane-dense matmul, X read once
        qkv = linear(x, lyr["qkv_w"], lyr["qkv_b"])                 # (B*S, 3H) bf16

        # head-major layout for attention: (3, B, n_heads, S, d_head)
        qkv_heads = qkv.reshape(B, S, 3, n_heads, d_head).transpose(2, 0, 3, 1, 4)
        ctx = attention(qkv_heads, mask_bias, scale=scale)          # (B, nH, S, d)

        # attention output proj (head axis is the contraction) + residual + LN fused
        attn_norm = attn_out_residual_ln(
            ctx, lyr["attn_out_w"].reshape(n_heads, d_head, H), lyr["attn_out_b"],
            x.reshape(B, S, H), lyr["attn_ln_g"], lyr["attn_ln_b"])  # (B, S, H) bf16

        # fused FFN: up-proj + GELU + down-proj + residual + LN, intermediate in VMEM
        hidden = ffn_residual_ln(attn_norm.reshape(B * S, H),
                                 lyr["inter_w"], lyr["inter_b"],
                                 lyr["out_w"], lyr["out_b"],
                                 lyr["out_ln_g"], lyr["out_ln_b"])   # (B*S, H) bf16
        hidden_states.append(hidden.reshape(B, S, H))

    last_hidden_state = hidden.reshape(B, S, H)

    # ---- pooler + classifier: tiny (B rows, N<=H / N=3) -> plain XLA dots,
    #      per perf review (pallas_call fixed cost + masked 3-wide stores dominate)
    cls = last_hidden_state[:, 0, :].astype(jnp.float32)            # (B, H)
    pooled = jnp.tanh(cls @ params["pooler_w"] + params["pooler_b"])  # (B, H) f32
    logits = pooled @ params["cls_w"] + params["cls_b"]             # (B, 3) f32
    # dropout before classifier: identity (eval mode)

    outputs = {
        "last_hidden_state": last_hidden_state,
        "pooler_output": pooled,
        "hidden_states": tuple(hidden_states),   # output_hidden_states=True
    }
    return outputs, logits


# ----------------------------------- main -----------------------------------

if __name__ == "__main__":
    cfg = dict(
        vocab_size=100,
        hidden_size=32,
        num_heads=4,
        num_layers=2,
        intermediate_size=128,
        max_position=64,
        type_vocab=2,
    )
    B, S = 2, 8

    key = jax.random.PRNGKey(0)
    k_params, k_ids = jax.random.split(key)
    params = init_params(k_params, cfg)

    input_ids = jax.random.randint(k_ids, (B, S), 0, cfg["vocab_size"], dtype=jnp.int32)
    token_type_ids = jnp.zeros((B, S), jnp.int32)
    attention_mask = jnp.ones((B, S), jnp.float32)

    outputs, logits = kornli_forward(params, cfg, input_ids, token_type_ids,
                                     attention_mask)
    jax.block_until_ready(logits)
    jax.block_until_ready(outputs["pooler_output"])
    jax.block_until_ready(outputs["last_hidden_state"])

    assert logits.shape == (B, 3)
    assert outputs["last_hidden_state"].shape == (B, S, cfg["hidden_size"])
    assert outputs["pooler_output"].shape == (B, cfg["hidden_size"])
    assert len(outputs["hidden_states"]) == cfg["num_layers"] + 1
    print("KERNEL_OK")
</pallas_src>

<mosaic_0001>
module attributes {stable_mosaic.version = 11 : i64} {
  func.func @_ln_kernel(%arg0: i32, %arg1: memref<16x32xbf16, #tpu.memory_space<vmem>>, %arg2: memref<1x32xf32, #tpu.memory_space<vmem>>, %arg3: memref<1x32xf32, #tpu.memory_space<vmem>>, %arg4: memref<16x32xbf16, #tpu.memory_space<vmem>>) attributes {dimension_semantics = [#tpu.dimension_semantics<parallel>], iteration_bounds = array<i64: 1>, scalar_prefetch = 0 : i64, scratch_operands = 0 : i64, tpu.core_type = #tpu.core_type<tc>, window_params = [{transform_indices = @transform_0, window_bounds = array<i64: 16, 32>}, {pipeline_mode = #tpu.pipeline_mode<synchronous>, transform_indices = @transform_1, window_bounds = array<i64: 1, 32>}, {pipeline_mode = #tpu.pipeline_mode<synchronous>, transform_indices = @transform_2, window_bounds = array<i64: 1, 32>}, {transform_indices = @transform_3, window_bounds = array<i64: 16, 32>}]} {
    %c0 = arith.constant 0 : index
    %c0_0 = arith.constant 0 : index
    %0 = vector.load %arg1[%c0, %c0_0] : memref<16x32xbf16, #tpu.memory_space<vmem>>, vector<16x32xbf16>
    %1 = arith.extf %0 : vector<16x32xbf16> to vector<16x32xf32>
    %cst = arith.constant dense<0.000000e+00> : vector<16xf32>
    %2 = vector.multi_reduction <add>, %1, %cst [1] : vector<16x32xf32> to vector<16xf32>
    %3 = vector.shape_cast %2 : vector<16xf32> to vector<16x1xf32>
    %cst_1 = arith.constant 3.200000e+01 : f32
    %4 = vector.broadcast %cst_1 : f32 to vector<16x1xf32>
    %5 = arith.divf %3, %4 : vector<16x1xf32>
    %6 = vector.broadcast %5 : vector<16x1xf32> to vector<16x32xf32>
    %7 = arith.subf %1, %6 : vector<16x32xf32>
    %8 = arith.mulf %7, %7 : vector<16x32xf32>
    %cst_2 = arith.constant dense<0.000000e+00> : vector<16xf32>
    %9 = vector.multi_reduction <add>, %8, %cst_2 [1] : vector<16x32xf32> to vector<16xf32>
    %10 = vector.shape_cast %9 : vector<16xf32> to vector<16x1xf32>
    %cst_3 = arith.constant 3.200000e+01 : f32
    %11 = vector.broadcast %cst_3 : f32 to vector<16x1xf32>
    %12 = arith.divf %10, %11 : vector<16x1xf32>
    %cst_4 = arith.constant 9.99999996E-13 : f32
    %13 = vector.broadcast %cst_4 : f32 to vector<16x1xf32>
    %14 = arith.addf %12, %13 : vector<16x1xf32>
    %15 = math.rsqrt %14 : vector<16x1xf32>
    %16 = vector.broadcast %15 : vector<16x1xf32> to vector<16x32xf32>
    %17 = arith.mulf %7, %16 : vector<16x32xf32>
    %c0_5 = arith.constant 0 : index
    %c0_6 = arith.constant 0 : index
    %18 = vector.load %arg2[%c0_5, %c0_6] : memref<1x32xf32, #tpu.memory_space<vmem>>, vector<1x32xf32>
    %19 = vector.broadcast %18 : vector<1x32xf32> to vector<16x32xf32>
    %20 = arith.mulf %17, %19 : vector<16x32xf32>
    %c0_7 = arith.constant 0 : index
    %c0_8 = arith.constant 0 : index
    %21 = vector.load %arg3[%c0_7, %c0_8] : memref<1x32xf32, #tpu.memory_space<vmem>>, vector<1x32xf32>
    %22 = vector.broadcast %21 : vector<1x32xf32> to vector<16x32xf32>
    %23 = arith.addf %20, %22 : vector<16x32xf32>
    %24 = arith.truncf %23 : vector<16x32xf32> to vector<16x32xbf16>
    %c0_9 = arith.constant 0 : index
    %c0_10 = arith.constant 0 : index
    %25 = vector.load %arg4[%c0_9, %c0_10] : memref<16x32xbf16, #tpu.memory_space<vmem>>, vector<16x32xbf16>
    tpu.vector_store %arg4[%c0_9, %c0_10], %24 {strides = array<i32>} : memref<16x32xbf16, #tpu.memory_space<vmem>>, vector<16x32xbf16>,
    return
  }
  func.func @transform_0(%arg0: i32) -> (i32, i32) {
    %c0_i32 = arith.constant 0 : i32
    %c0_i32_0 = arith.constant 0 : i32
    return %arg0, %c0_i32 : i32, i32
  }
  func.func @transform_1(%arg0: i32) -> (i32, i32) {
    %c0_i32 = arith.constant 0 : i32
    %c0_i32_0 = arith.constant 0 : i32
    %c0_i32_1 = arith.constant 0 : i32
    return %c0_i32, %c0_i32_0 : i32, i32
  }
  func.func @transform_2(%arg0: i32) -> (i32, i32) {
    %c0_i32 = arith.constant 0 : i32
    %c0_i32_0 = arith.constant 0 : i32
    %c0_i32_1 = arith.constant 0 : i32
    return %c0_i32, %c0_i32_0 : i32, i32
  }
  func.func @transform_3(%arg0: i32) -> (i32, i32) {
    %c0_i32 = arith.constant 0 : i32
    %c0_i32_0 = arith.constant 0 : i32
    return %arg0, %c0_i32 : i32, i32
  }
}

</mosaic_0001>

<llo_original>
// kernel: tpu_custom_call.1
$region0: #{tpu_custom_call.1}
  #allocation0 [shape = 'u32[]', space=smem, size = 0x4, offset = 0x4, fixed_abs, tag = 'smem constant byte address 0x4 - core index']
  #allocation1 [shape = 'u32[144,128]{1,0:T(1,128)}', space=vmem, size = 0x12000, scoped, tag = 'internal scratch']
  %s0 = inlined_call_operand.hbm [shape: bf16[16,32], index: 0, kind: input, shape index: {}]
  %s1 = inlined_call_operand.vmem [shape: f32[1,32], index: 1, kind: input, shape index: {}]
  %s2 = inlined_call_operand.vmem [shape: f32[1,32], index: 2, kind: input, shape index: {}]
  %s3 = inlined_call_operand.hbm [shape: bf16[16,32], index: 3, kind: output, shape index: {}]
  %s4 = sld [smem:[#allocation0]]
  $region26: #{tpu_custom_call.1} parent=0
    _
  %s6 = ssub.s32 1, %s4
  %s7 = scalar_select 0, %s6, %s4
  $region1: #{tpu_custom_call.1} parent=0
    #allocation2 [shape = 'u8[4096]{0}', space=vmem, size = 0x1000, scoped, tag = 'input window, operand 0, single buffered']
    #allocation3 [shape = 's32[1]{0}', space=sflag, size = 0x4, scoped, tag = 'scoped memory for tpu_custom_call.1']
    #allocation4 [shape = 's32[1]{0}', space=sflag, size = 0x4, scoped, tag = 'scoped memory for tpu_custom_call.1']
    #allocation5 [shape = 'u8[4096]{0}', space=vmem, size = 0x1000, scoped, tag = 'output window, operand 0, single buffered']
    %8 = vsyncpa [#allocation3], 0
    %9 = vsyncpa [#allocation4], 0
    // Predicated region
    $region2: #{tpu_custom_call.1} parent=1 // pred_check
      _
    $region3: #{tpu_custom_call.1} parent=1 // pred_check_branch
      %11 = sbr.rel (0) target = $region5
    $region4: #{tpu_custom_call.1} parent=1 // pred_region
      %s13 = ssub.s32 128, 128
      %14 = vsyncadd [#allocation3], %s13
      %s15 = sshll.u32 [#allocation2], 4
      %s16 = int_to_ptr.vmem [resolvable:$true] %s15
      %21 = dma.hbm_to_vmem [thread:$0]  %s0, 128, %s16, [#allocation3], 64, 64, 4
    $region5: #{tpu_custom_call.1} parent=1 // pred_fallthru
      _
    // Predicated region
    $region6: #{tpu_custom_call.1} parent=1 // pred_check
      _
    $region7: #{tpu_custom_call.1} parent=1 // pred_check_branch
      %23 = sbr.rel (0) target = $region9
    $region8: #{tpu_custom_call.1} parent=1 // pred_region
      _
    $region9: #{tpu_custom_call.1} parent=1 // pred_fallthru
      _
    // Predicated region
    $region10: #{tpu_custom_call.1} parent=1 // pred_check
      _
    $region11: #{tpu_custom_call.1} parent=1 // pred_check_branch
      %25 = sbr.rel (0) target = $region13
    $region12: #{tpu_custom_call.1} parent=1 // pred_region
      _
    $region13: #{tpu_custom_call.1} parent=1 // pred_fallthru
      _
    // Predicated region
    $region14: #{tpu_custom_call.1} parent=1 // pred_check
      _
    $region15: #{tpu_custom_call.1} parent=1 // pred_check_branch
      %27 = sbr.rel (0) target = $region17
    $region16: #{tpu_custom_call.1} parent=1 // pred_region
      %28 = dma.done [#allocation3], 128
    $region17: #{tpu_custom_call.1} parent=1 // pred_fallthru
      _
    %v29 = vld [vmem:[#allocation2] sm:$0xf]
    %v30 = vld [vmem:[#allocation2 + $0x4] sm:$0xf]
    %v31 = vunpack.c.l.bf16 %v29
    %v32 = vunpack.c.l.bf16 %v30
    %vm33 = vcmask 261120
    %v34 = vsel %vm33, %v31, 0.0
    %35 = vadd.xlane.f32.xlu0 %v34
    %v36 = vpop.xlane.xlu0 %35
    %v37 = vsel %vm33, %v32, 0.0
    %38 = vadd.xlane.f32.xlu0 %v37
    %v39 = vpop.xlane.xlu0 %38
    %v40 = vrcp.pop 32.0
    %v41 = vmul.f32 %v36, %v40
    %v42 = vmul.f32 %v39, %v40
    %v43 = vsub.f32 %v31, %v41
    %v44 = vsub.f32 %v32, %v42
    %v45 = vmul.f32 %v43, %v43
    %v46 = vmul.f32 %v44, %v44
    %v47 = vsel %vm33, %v45, 0.0
    %48 = vadd.xlane.f32.xlu0 %v47
    %v49 = vpop.xlane.xlu0 %48
    %v50 = vsel %vm33, %v46, 0.0
    %51 = vadd.xlane.f32.xlu0 %v50
    %v52 = vpop.xlane.xlu0 %51
    %v53 = vmul.f32 %v49, %v40
    %v54 = vmul.f32 %v52, %v40
    %v55 = vadd.f32 %v53, 1e-12
    %v56 = vadd.f32 %v54, 1e-12
    %v57 = vrsqrt.pop %v55
    %v58 = vrsqrt.pop %v56
    %v59 = vmul.f32 %v43, %v57
    %v60 = vmul.f32 %v44, %v58
    %v61 = vld [vmem:[%s1] sm:$0x1]
    %v63 = vlaneseq
    %v64 = vshrl.u32 %v63, 7
    %v65 = vsub.s32 0, %v64
    %v66 = vrot.slane %v61, %v65
    %v68 = vmul.f32 %v59, %v66
    %v69 = vmul.f32 %v60, %v66
    %v70 = vld [vmem:[%s2] sm:$0x1]
    %v72 = vlaneseq
    %v73 = vshrl.u32 %v72, 7
    %v74 = vsub.s32 0, %v73
    %v75 = vrot.slane %v70, %v74
    %v77 = vadd.f32 %v68, %v75
    %v78 = vadd.f32 %v69, %v75
    %v79 = vpack.c.bf16 %v78, %v77
    %v81 = vunpack.c.l.b16 %v79
    %v82 = vunpack.c.h.b16 %v79
    %v83 = vpack.c.b16 %v81, %v81
    %v84 = vpack.c.b16 %v82, %v82
    %vm87 = vcmask 257024
    %88 = vst.msk [vmem:[#allocation5] sm:$0xf] %vm87, %v83
    %89 = vst.msk [vmem:[#allocation5 + $0x4] sm:$0xf] %vm87, %v84
    // Predicated region
    $region18: #{tpu_custom_call.1} parent=1 // pred_check
      _
    $region19: #{tpu_custom_call.1} parent=1 // pred_check_branch
      %91 = sbr.rel (0) target = $region21
    $region20: #{tpu_custom_call.1} parent=1 // pred_region
      %s93 = ssub.s32 128, 128
      %94 = vsyncadd [#allocation4], %s93
      %s95 = sshll.u32 [#allocation5], 4
      %s96 = int_to_ptr.vmem [resolvable:$true] %s95
      %101 = dma.vmem_to_hbm [thread:$0]  %s96, 128, %s3, [#allocation4], 64, 64, 4
    $region21: #{tpu_custom_call.1} parent=1 // pred_fallthru
      _
    // Predicated region
    $region22: #{tpu_custom_call.1} parent=1 // pred_check
      _
    $region23: #{tpu_custom_call.1} parent=1 // pred_check_branch
      %103 = sbr.rel (0) target = $region25
    $region24: #{tpu_custom_call.1} parent=1 // pred_region
      %104 = dma.done [#allocation4], 128
    $region25: #{tpu_custom_call.1} parent=1 // pred_fallthru
      _
    %105 = vsyncpa [#allocation3], 1
    %106 = vsyncpa [#allocation4], 1

</llo_original>
